<compile_context>
chip_gen: v6e
topology: v6e:2x2x1
jax: 0.10.0
libtpu: 0.0.40
codegen_flags: <defaults>
</compile_context>

<pallas_src>
import functools

import jax
import jax.numpy as jnp
from jax.experimental import pallas as pl
from jax.experimental.pallas import tpu as pltpu


def _round_up(x, m):
    return ((x + m - 1) // m) * m


def gcn_layer_kernel(adj_ref, h_ref, wt_ref, b_ref, o_ref, acc_ref, *, tk, h_is_resident):
    k = pl.program_id(1)

    @pl.when(k == 0)
    def _():
        acc_ref[...] = jnp.zeros_like(acc_ref)

    # Partial aggregation over this tile of source nodes: bf16 MXU, f32 accumulate.
    if h_is_resident:
        # H lives in VMEM once; pick out the k-th strip of source nodes.
        start = pl.multiple_of(k * tk, tk)
        h_tile = h_ref[pl.ds(start, tk), :]
    else:
        h_tile = h_ref[...]
    acc_ref[...] += jnp.dot(adj_ref[...], h_tile, preferred_element_type=jnp.float32)

    @pl.when(k == pl.num_programs(1) - 1)
    def _():
        # Linear + bias + ReLU epilogue on the fully-aggregated rows, all in f32.
        z = (
            jnp.dot(acc_ref[...], wt_ref[...], preferred_element_type=jnp.float32)
            + b_ref[...]
        )
        o_ref[...] = jnp.maximum(z, 0.0).astype(o_ref.dtype)


def gcn_layer(adj, h, w, b, *, tm_max=512, tk_max=1024):
    """adj: [N, N] (A[dst, src]=1), h: [N, F_in], w: [F_out, F_in], b: [F_out]."""
    n, f_in = h.shape
    f_out = w.shape[0]

    # ---- Tile selection (lane-dense, MXU friendly, VMEM aware) ----------------
    f_in_p = _round_up(f_in, 128)
    f_out_p = _round_up(f_out, 128)

    tm = min(tm_max, _round_up(n, 128))
    # Keep >= 2 row tiles when possible so the "parallel" row axis feeds both
    # TensorCores on v7x megacore.
    if _round_up(n, tm) // tm < 2 and tm > 128:
        tm = max(128, _round_up(pl.cdiv(n, 2), 128))
    n_rows = _round_up(n, tm)

    tk = min(tk_max, _round_up(n, 128))
    n_cols = _round_up(n, tk)

    # Keep H fully VMEM-resident (streamed from HBM exactly once) when small enough.
    h_bytes = n_cols * f_in_p * 2  # bf16
    h_is_resident = h_bytes <= (8 << 20)

    # ---- Padding / casts (single pass; skipped when already aligned) ----------
    adj_b = adj.astype(jnp.bfloat16)
    if adj_b.shape != (n_rows, n_cols):
        adj_b = jnp.pad(adj_b, ((0, n_rows - n), (0, n_cols - n)))

    h_b = h.astype(jnp.bfloat16)
    if h_b.shape != (n_cols, f_in_p):
        h_b = jnp.pad(h_b, ((0, n_cols - n), (0, f_in_p - f_in)))

    wt_f = w.T.astype(jnp.float32)
    if wt_f.shape != (f_in_p, f_out_p):
        wt_f = jnp.pad(wt_f, ((0, f_in_p - f_in), (0, f_out_p - f_out)))

    b_f = b.astype(jnp.float32).reshape(1, f_out)
    if b_f.shape != (1, f_out_p):
        b_f = jnp.pad(b_f, ((0, 0), (0, f_out_p - f_out)))

    grid = (n_rows // tm, n_cols // tk)

    # ---- H BlockSpec: resident (constant index_map) or streamed per k ---------
    if h_is_resident:
        h_spec = pl.BlockSpec((n_cols, f_in_p), lambda i, k: (0, 0))
        h_stream_mult = 1
    else:
        h_spec = pl.BlockSpec((tk, f_in_p), lambda i, k: (k, 0))
        h_stream_mult = grid[0]

    # ---- VMEM budget (double-count everything conservatively), cap for v7x ----
    vmem_bytes = (
        2 * tm * tk * 2                                          # A tiles (bf16, x2)
        + (2 * h_bytes if h_is_resident else 2 * tk * f_in_p * 2)  # H
        + 2 * f_in_p * f_out_p * 4                               # resident W^T (f32)
        + 2 * f_out_p * 4                                        # resident bias
        + tm * f_in_p * 4                                        # f32 accumulator
        + 2 * tm * f_out_p * 4                                   # output tiles (f32)
    )
    vmem_limit = int(min(max(vmem_bytes + (4 << 20), 32 << 20), 48 << 20))

    cost = pl.CostEstimate(
        flops=2 * n_rows * n_cols * f_in_p + 2 * n_rows * f_in_p * f_out_p,
        transcendentals=0,
        bytes_accessed=(
            n_rows * n_cols * 2                    # A streamed once
            + h_bytes * h_stream_mult              # H once (resident) or per row tile
            + f_in_p * f_out_p * 4                 # W^T
            + f_out_p * 4                          # bias
            + n_rows * f_out_p * 4                 # output
        ),
    )

    kernel = functools.partial(gcn_layer_kernel, tk=tk, h_is_resident=h_is_resident)

    out_p = pl.pallas_call(
        kernel,
        out_shape=jax.ShapeDtypeStruct((n_rows, f_out_p), jnp.float32),
        grid_spec=pltpu.PrefetchScalarGridSpec(
            num_scalar_prefetch=0,
            grid=grid,
            in_specs=[
                pl.BlockSpec((tm, tk), lambda i, k: (i, k)),           # A tile
                h_spec,                                                # H (resident/streamed)
                pl.BlockSpec((f_in_p, f_out_p), lambda i, k: (0, 0)),  # resident W^T (f32)
                pl.BlockSpec((1, f_out_p), lambda i, k: (0, 0)),       # resident bias
            ],
            out_specs=pl.BlockSpec((tm, f_out_p), lambda i, k: (i, 0)),
            scratch_shapes=[pltpu.VMEM((tm, f_in_p), jnp.float32)],
        ),
        compiler_params=pltpu.CompilerParams(
            dimension_semantics=("parallel", "arbitrary"),
            vmem_limit_bytes=vmem_limit,
        ),
        cost_estimate=cost,
    )(adj_b, h_b, wt_f, b_f)

    # Padded rows/cols compute relu(bias) but are sliced off here (callers must
    # always go through this wrapper).
    return out_p[:n, :f_out]


if __name__ == "__main__":
    key = jax.random.PRNGKey(0)
    k_adj, k_h, k_w, k_b = jax.random.split(key, 4)

    # Small but non-trivial shapes: exercises >=2 row tiles (megacore path), the
    # resident-H path, the reduction accumulator, and feature padding (64->128, 96->128).
    N = 256
    IN_FEATS = 64
    OUT_FEATS = 96

    # Deterministic synthetic graph: random sparse-ish binary adjacency
    # (A[dst, src] = 1 means edge src -> dst).
    adj = (jax.random.uniform(k_adj, (N, N)) < 0.3).astype(jnp.float32)

    # Node features.
    h = jax.random.normal(k_h, (N, IN_FEATS), dtype=jnp.float32)

    # nn.Linear(in_feats, out_feats) parameters, deterministic init.
    bound = 1.0 / (IN_FEATS ** 0.5)
    w = jax.random.uniform(
        k_w, (OUT_FEATS, IN_FEATS), minval=-bound, maxval=bound, dtype=jnp.float32
    )
    b = jax.random.uniform(
        k_b, (OUT_FEATS,), minval=-bound, maxval=bound, dtype=jnp.float32
    )

    out = gcn_layer(adj, h, w, b)
    out = jax.block_until_ready(out)

    # Cross-check against a pure-JAX f32 reference of the same math.
    # The adjacency is exact in bf16 and the epilogue is now fully f32, so the
    # only quantization left is the bf16 cast of H -> tighter tolerance than before.
    ref = jnp.maximum((adj @ h) @ w.T + b, 0.0)
    assert out.shape == ref.shape, "shape mismatch vs reference"
    assert jnp.allclose(out, ref, atol=1e-1, rtol=1e-2), "mismatch vs reference"

    print("KERNEL_OK")
</pallas_src>

<mosaic_0001>
module attributes {stable_mosaic.version = 11 : i64} {
  func.func @gcn_layer_kernel(%arg0: i32, %arg1: i32, %arg2: memref<128x256xbf16, #tpu.memory_space<vmem>>, %arg3: memref<256x128xbf16, #tpu.memory_space<vmem>>, %arg4: memref<128x128xf32, #tpu.memory_space<vmem>>, %arg5: memref<1x128xf32, #tpu.memory_space<vmem>>, %arg6: memref<128x128xf32, #tpu.memory_space<vmem>>, %arg7: memref<128x128xf32, #tpu.memory_space<vmem>>) attributes {dimension_semantics = [#tpu.dimension_semantics<parallel>, #tpu.dimension_semantics<arbitrary>], iteration_bounds = array<i64: 2, 1>, scalar_prefetch = 0 : i64, scratch_operands = 1 : i64, tpu.core_type = #tpu.core_type<tc>, window_params = [{transform_indices = @transform_0, window_bounds = array<i64: 128, 256>}, {pipeline_mode = #tpu.pipeline_mode<synchronous>, transform_indices = @transform_1, window_bounds = array<i64: 256, 128>}, {pipeline_mode = #tpu.pipeline_mode<synchronous>, transform_indices = @transform_2, window_bounds = array<i64: 128, 128>}, {pipeline_mode = #tpu.pipeline_mode<synchronous>, transform_indices = @transform_3, window_bounds = array<i64: 1, 128>}, {transform_indices = @transform_4, window_bounds = array<i64: 128, 128>}]} {
    %c0_i32 = arith.constant 0 : i32
    %0 = arith.cmpi eq, %arg1, %c0_i32 : i32
    %1 = arith.extui %0 : i1 to i32
    %c0_i32_0 = arith.constant 0 : i32
    %2 = arith.cmpi ne, %1, %c0_i32_0 : i32
    scf.if %2 {
      %cst_9 = arith.constant 0.000000e+00 : f32
      %15 = vector.broadcast %cst_9 : f32 to vector<128x128xf32>
      %c0_10 = arith.constant 0 : index
      %c0_11 = arith.constant 0 : index
      %16 = vector.load %arg7[%c0_10, %c0_11] : memref<128x128xf32, #tpu.memory_space<vmem>>, vector<128x128xf32>
      tpu.vector_store %arg7[%c0_10, %c0_11], %15 {strides = array<i32>} : memref<128x128xf32, #tpu.memory_space<vmem>>, vector<128x128xf32>,
    } else {
    }
    %c256_i32 = arith.constant 256 : i32
    %3 = arith.muli %arg1, %c256_i32 : i32
    %4 = tpu.assume_multiple %3, 256 : i32
    %5 = arith.index_cast %4 : i32 to index
    %c0 = arith.constant 0 : index
    %6 = vector.load %arg3[%5, %c0] : memref<256x128xbf16, #tpu.memory_space<vmem>>, vector<256x128xbf16>
    %c0_1 = arith.constant 0 : index
    %c0_2 = arith.constant 0 : index
    %7 = vector.load %arg7[%c0_1, %c0_2] : memref<128x128xf32, #tpu.memory_space<vmem>>, vector<128x128xf32>
    %c0_3 = arith.constant 0 : index
    %c0_4 = arith.constant 0 : index
    %8 = vector.load %arg2[%c0_3, %c0_4] : memref<128x256xbf16, #tpu.memory_space<vmem>>, vector<128x256xbf16>
    %cst = arith.constant dense<0.000000e+00> : vector<128x128xf32>
    %9 = tpu.matmul %8, %6, %cst {dimension_numbers = #tpu.dot_dimension_numbers<[1], [0], [0], [1], [0, 0, 1, 1], [], []>} : vector<128x256xbf16>, vector<256x128xbf16>, vector<128x128xf32> -> vector<128x128xf32>
    %10 = arith.addf %7, %9 : vector<128x128xf32>
    %c0_5 = arith.constant 0 : index
    %c0_6 = arith.constant 0 : index
    %11 = vector.load %arg7[%c0_5, %c0_6] : memref<128x128xf32, #tpu.memory_space<vmem>>, vector<128x128xf32>
    tpu.vector_store %arg7[%c0_5, %c0_6], %10 {strides = array<i32>} : memref<128x128xf32, #tpu.memory_space<vmem>>, vector<128x128xf32>,
    %c0_i32_7 = arith.constant 0 : i32
    %12 = arith.cmpi eq, %arg1, %c0_i32_7 : i32
    %13 = arith.extui %12 : i1 to i32
    %c0_i32_8 = arith.constant 0 : i32
    %14 = arith.cmpi ne, %13, %c0_i32_8 : i32
    scf.if %14 {
      %c0_9 = arith.constant 0 : index
      %c0_10 = arith.constant 0 : index
      %15 = vector.load %arg7[%c0_9, %c0_10] : memref<128x128xf32, #tpu.memory_space<vmem>>, vector<128x128xf32>
      %c0_11 = arith.constant 0 : index
      %c0_12 = arith.constant 0 : index
      %16 = vector.load %arg4[%c0_11, %c0_12] : memref<128x128xf32, #tpu.memory_space<vmem>>, vector<128x128xf32>
      %cst_13 = arith.constant dense<0.000000e+00> : vector<128x128xf32>
      %17 = tpu.matmul %15, %16, %cst_13 {dimension_numbers = #tpu.dot_dimension_numbers<[1], [0], [0], [1], [0, 0, 1, 1], [], []>} : vector<128x128xf32>, vector<128x128xf32>, vector<128x128xf32> -> vector<128x128xf32>
      %c0_14 = arith.constant 0 : index
      %c0_15 = arith.constant 0 : index
      %18 = vector.load %arg5[%c0_14, %c0_15] : memref<1x128xf32, #tpu.memory_space<vmem>>, vector<1x128xf32>
      %19 = vector.broadcast %18 : vector<1x128xf32> to vector<128x128xf32>
      %20 = arith.addf %17, %19 : vector<128x128xf32>
      %cst_16 = arith.constant 0.000000e+00 : f32
      %21 = vector.broadcast %cst_16 : f32 to vector<128x128xf32>
      %22 = arith.maximumf %20, %21 : vector<128x128xf32>
      %c0_17 = arith.constant 0 : index
      %c0_18 = arith.constant 0 : index
      %23 = vector.load %arg6[%c0_17, %c0_18] : memref<128x128xf32, #tpu.memory_space<vmem>>, vector<128x128xf32>
      tpu.vector_store %arg6[%c0_17, %c0_18], %22 {strides = array<i32>} : memref<128x128xf32, #tpu.memory_space<vmem>>, vector<128x128xf32>,
    } else {
    }
    return
  }
  func.func @transform_0(%arg0: i32, %arg1: i32) -> (i32, i32) {
    %c0_i32 = arith.constant 0 : i32
    return %arg0, %arg1 : i32, i32
  }
  func.func @transform_1(%arg0: i32, %arg1: i32) -> (i32, i32) {
    %c0_i32 = arith.constant 0 : i32
    %c0_i32_0 = arith.constant 0 : i32
    %c0_i32_1 = arith.constant 0 : i32
    return %c0_i32, %c0_i32_0 : i32, i32
  }
  func.func @transform_2(%arg0: i32, %arg1: i32) -> (i32, i32) {
    %c0_i32 = arith.constant 0 : i32
    %c0_i32_0 = arith.constant 0 : i32
    %c0_i32_1 = arith.constant 0 : i32
    return %c0_i32, %c0_i32_0 : i32, i32
  }
  func.func @transform_3(%arg0: i32, %arg1: i32) -> (i32, i32) {
    %c0_i32 = arith.constant 0 : i32
    %c0_i32_0 = arith.constant 0 : i32
    %c0_i32_1 = arith.constant 0 : i32
    return %c0_i32, %c0_i32_0 : i32, i32
  }
  func.func @transform_4(%arg0: i32, %arg1: i32) -> (i32, i32) {
    %c0_i32 = arith.constant 0 : i32
    %c0_i32_0 = arith.constant 0 : i32
    return %arg0, %c0_i32 : i32, i32
  }
}

</mosaic_0001>

<llo_original>
// kernel: tpu_custom_call.1
$region0: #{tpu_custom_call.1}
  #allocation0 [shape = 'u32[]', space=smem, size = 0x4, offset = 0x4, fixed_abs, tag = 'smem constant byte address 0x4 - core index']
  #allocation1 [shape = 'u32[144,128]{1,0:T(1,128)}', space=vmem, size = 0x12000, scoped, tag = 'internal scratch']
  #allocation2 [shape = 'f32[128,128]{1,0:T(8,128)}', space=vmem, size = 0x10000, scoped, tag = 'scratch operand']
  %s0 = inlined_call_operand.hbm [shape: bf16[256,256], index: 0, kind: input, shape index: {}]
  %s1 = inlined_call_operand.hbm [shape: bf16[256,128], index: 1, kind: input, shape index: {}]
  %s2 = inlined_call_operand.hbm [shape: f32[128,128], index: 2, kind: input, shape index: {}]
  %s3 = inlined_call_operand.vmem [shape: f32[1,128], index: 3, kind: input, shape index: {}]
  %s4 = inlined_call_operand.hbm [shape: f32[256,128], index: 4, kind: output, shape index: {}]
  %s5 = sld [smem:[#allocation0]]
  $region69: #{tpu_custom_call.1} parent=0
    _
  %s7 = ssub.s32 1, %s5
  %s8 = scalar_select 0, %s7, %s5
  $region1: #{tpu_custom_call.1} parent=0
    #allocation3 [shape = 'u8[131072]{0}', space=vmem, size = 0x20000, scoped, tag = 'input window, operand 0']
    #allocation4 [shape = 's32[2]{0}', space=sflag, size = 0x8, scoped, tag = 'scoped memory for tpu_custom_call.1']
    #allocation5 [shape = 's32[2]{0}', space=sflag, size = 0x8, scoped, tag = 'scoped memory for tpu_custom_call.1']
    #allocation6 [shape = 'u8[65536]{0}', space=vmem, size = 0x10000, scoped, tag = 'input window, operand 1, single buffered']
    #allocation7 [shape = 's32[1]{0}', space=sflag, size = 0x4, scoped, tag = 'scoped memory for tpu_custom_call.1']
    #allocation8 [shape = 'u8[65536]{0}', space=vmem, size = 0x10000, scoped, tag = 'input window, operand 2, single buffered']
    #allocation9 [shape = 'u8[131072]{0}', space=vmem, size = 0x20000, scoped, tag = 'output window, operand 0']
    %9 = vsyncpa [#allocation4], 0
    %s10 = scalar_lea.sflag [#allocation4], 1
    %11 = vsyncpa %s10, 0
    %12 = vsyncpa [#allocation7], 0
    %13 = vsyncpa [#allocation5], 0
    %s14 = scalar_lea.sflag [#allocation5], 1
    %15 = vsyncpa %s14, 0
    loop: start=0, step=1, limit=4
    $region2: #{tpu_custom_call.1} parent=1 // loop_pre_header
      _
    $region3: #{tpu_custom_call.1} parent=1 // loop_header
      %s17 = sphi 0, %s21
      %p18 = scmp.ge.s32.totalorder %s17, 4
      %s24 = sphi 0, %s36
      %s25 = sphi 0, %s32
      %s26 = sphi 0, %s24
      %s27 = sphi 0, %s25
      %s28 = sphi 0, %s26
      %s29 = sphi 0, %s27
      %s41 = sphi 0, %s43
      %s44 = sphi 0, %s41
      %s45 = sphi 0, %s44
      %s61 = sphi 0, %s45
      %s65 = sphi 0, %s65
      %s67 = sphi 0, %s65
      %s68 = sphi 0, %s67
      %s82 = sphi 0, %s68
      %s86 = sphi 0, %s86
      %s88 = sphi 0, %s86
      %s89 = sphi 0, %s88
      %s103 = sphi 0, %s89
      %s107 = sphi 0, %s107
      %s109 = sphi 0, %s107
      %s110 = sphi 0, %s109
      %s124 = sphi 0, %s110
      %s130 = sphi 0, %s132
      %s133 = sphi 0, %s130
      %s134 = sphi 0, %s133
      %s150 = sphi 0, %s134
    $region4: #{tpu_custom_call.1} parent=1 // loop_header_branch
      %20 = sbr.rel (%p18) target = $region8
    $region5: #{tpu_custom_call.1} parent=1 // loop_body
      %s22 = ssub.s32 %s17, 1
      %s23 = ssub.s32 %s17, 2
      %s30 = sadd.s32 1, %s25
      %p31 = scmp.ge.s32.totalorder %s30, 1
      %s32 = scalar_select %p31, 0, %s30
      %s33 = sadd.s32 1, %s24
      %s34 = scalar_select %p31, %s33, %s24
      %p35 = scmp.ge.s32.totalorder %s34, 2
      %s36 = scalar_select %p35, 0, %s34
      %s37 = ssub.s32 %s24, %s36
      %s38 = ssub.s32 %s25, %s32
      %s39 = sor.u32 %s37, %s38
      %p40 = scmp.eq.s32.totalorder %s39, 0
      %s42 = sadd.s32 %s41, 1
      %s43 = scalar_select %p40, %s41, %s42
      %p46 = pneg %p40
      %p47 = scmp.eq.s32.totalorder %s17, 1
      %p48 = por %p46, %p47
      %p49 = scmp.ne.s32.totalorder %s41, %s44
      %p50 = scmp.eq.s32.totalorder %s17, 0
      %p51 = por %p49, %p50
      %p52 = scmp.ne.s32.totalorder %s41, %s44
      %p53 = scmp.eq.s32.totalorder %s22, 1
      %p54 = por %p52, %p53
      %p55 = scmp.ne.s32.totalorder %s44, %s45
      %p56 = scmp.eq.s32.totalorder %s22, 0
      %p57 = por %p55, %p56
      %p58 = scmp.ne.s32.totalorder %s44, %s45
      %p59 = scmp.eq.s32.totalorder %s23, 1
      %p60 = por %p58, %p59
      %p62 = scmp.ne.s32.totalorder %s45, %s61
      %p63 = scmp.eq.s32.totalorder %s23, 0
      %p64 = por %p62, %p63
      %s66 = sadd.s32 %s65, 1
      %p69 = scmp.eq.s32.totalorder %s17, 1
      %p70 = scmp.ne.s32.totalorder %s65, %s67
      %p71 = scmp.eq.s32.totalorder %s17, 0
      %p72 = por %p70, %p71
      %p73 = scmp.ne.s32.totalorder %s65, %s67
      %p74 = scmp.eq.s32.totalorder %s22, 1
      %p75 = por %p73, %p74
      %p76 = scmp.ne.s32.totalorder %s67, %s68
      %p77 = scmp.eq.s32.totalorder %s22, 0
      %p78 = por %p76, %p77
      %p79 = scmp.ne.s32.totalorder %s67, %s68
      %p80 = scmp.eq.s32.totalorder %s23, 1
      %p81 = por %p79, %p80
      %p83 = scmp.ne.s32.totalorder %s68, %s82
      %p84 = scmp.eq.s32.totalorder %s23, 0
      %p85 = por %p83, %p84
      %s87 = sadd.s32 %s86, 1
      %p90 = scmp.eq.s32.totalorder %s17, 1
      %p91 = scmp.ne.s32.totalorder %s86, %s88
      %p92 = scmp.eq.s32.totalorder %s17, 0
      %p93 = por %p91, %p92
      %p94 = scmp.ne.s32.totalorder %s86, %s88
      %p95 = scmp.eq.s32.totalorder %s22, 1
      %p96 = por %p94, %p95
      %p97 = scmp.ne.s32.totalorder %s88, %s89
      %p98 = scmp.eq.s32.totalorder %s22, 0
      %p99 = por %p97, %p98
      %p100 = scmp.ne.s32.totalorder %s88, %s89
      %p101 = scmp.eq.s32.totalorder %s23, 1
      %p102 = por %p100, %p101
      %p104 = scmp.ne.s32.totalorder %s89, %s103
      %p105 = scmp.eq.s32.totalorder %s23, 0
      %p106 = por %p104, %p105
      %s108 = sadd.s32 %s107, 1
      %p111 = scmp.eq.s32.totalorder %s17, 1
      %p112 = scmp.ne.s32.totalorder %s107, %s109
      %p113 = scmp.eq.s32.totalorder %s17, 0
      %p114 = por %p112, %p113
      %p115 = scmp.ne.s32.totalorder %s107, %s109
      %p116 = scmp.eq.s32.totalorder %s22, 1
      %p117 = por %p115, %p116
      %p118 = scmp.ne.s32.totalorder %s109, %s110
      %p119 = scmp.eq.s32.totalorder %s22, 0
      %p120 = por %p118, %p119
      %p121 = scmp.ne.s32.totalorder %s109, %s110
      %p122 = scmp.eq.s32.totalorder %s23, 1
      %p123 = por %p121, %p122
      %p125 = scmp.ne.s32.totalorder %s110, %s124
      %p126 = scmp.eq.s32.totalorder %s23, 0
      %p127 = por %p125, %p126
      %s128 = ssub.s32 %s24, %s36
      %p129 = scmp.eq.s32.totalorder %s128, 0
      %s131 = sadd.s32 %s130, 1
      %s132 = scalar_select %p129, %s130, %s131
      %p135 = pneg %p129
      %p136 = scmp.eq.s32.totalorder %s17, 1
      %p137 = por %p135, %p136
      %p138 = scmp.ne.s32.totalorder %s130, %s133
      %p139 = scmp.eq.s32.totalorder %s17, 0
      %p140 = por %p138, %p139
      %p141 = scmp.ne.s32.totalorder %s130, %s133
      %p142 = scmp.eq.s32.totalorder %s22, 1
      %p143 = por %p141, %p142
      %p144 = scmp.ne.s32.totalorder %s133, %s134
      %p145 = scmp.eq.s32.totalorder %s22, 0
      %p146 = por %p144, %p145
      %p147 = scmp.ne.s32.totalorder %s133, %s134
      %p148 = scmp.eq.s32.totalorder %s23, 1
      %p149 = por %p147, %p148
      %p151 = scmp.ne.s32.totalorder %s134, %s150
      %p152 = scmp.eq.s32.totalorder %s23, 0
      %p153 = por %p151, %p152
      %p154 = scmp.le.s32.totalorder 1, %s17
      %p155 = scmp.lt.s32.totalorder %s17, 3
      %p156 = pnand %p154, %p155
      %p157 = pneg %p156
      // Predicated region
      $region9: #{tpu_custom_call.1} parent=5 // pred_check
        _
      $region10: #{tpu_custom_call.1} parent=5 // pred_check_branch
        %159 = sbr.rel (%p156) target = $region12
      $region11: #{tpu_custom_call.1} parent=5 // pred_region
        %s160 = ssub.s32 %s17, 1
        // Predicated region
        $region13: #{tpu_custom_call.1} parent=11 // pred_check
          %p161 = pneg %p78
        $region14: #{tpu_custom_call.1} parent=11 // pred_check_branch
          %163 = sbr.rel (%p161) target = $region16
        $region15: #{tpu_custom_call.1} parent=11 // pred_region
          %s165 = ssub.s32 2048, 2048
          %166 = vsyncadd [#allocation7], %s165
          %s167 = sshll.u32 [#allocation6], 4
          %s168 = int_to_ptr.vmem [resolvable:$true] %s167
          %173 = dma.hbm_to_vmem [thread:$0]  %s1, 2048, %s168, [#allocation7], 64, 64, 4
        $region16: #{tpu_custom_call.1} parent=11 // pred_fallthru
          _
        // Predicated region
        $region17: #{tpu_custom_call.1} parent=11 // pred_check
          %p174 = pneg %p99
        $region18: #{tpu_custom_call.1} parent=11 // pred_check_branch
          %176 = sbr.rel (%p174) target = $region20
        $region19: #{tpu_custom_call.1} parent=11 // pred_region
          %s178 = ssub.s32 2048, 2048
          %179 = vsyncadd [#allocation7], %s178
          %s180 = sshll.u32 [#allocation8], 4
          %s181 = int_to_ptr.vmem [resolvable:$true] %s180
          %186 = dma.hbm_to_vmem [thread:$0]  %s2, 2048, %s181, [#allocation7], 128, 128, 8
        $region20: #{tpu_custom_call.1} parent=11 // pred_fallthru
          _
        // Predicated region
        $region21: #{tpu_custom_call.1} parent=11 // pred_check
          %p187 = pneg %p120
        $region22: #{tpu_custom_call.1} parent=11 // pred_check_branch
          %189 = sbr.rel (%p187) target = $region24
        $region23: #{tpu_custom_call.1} parent=11 // pred_region
          _
        $region24: #{tpu_custom_call.1} parent=11 // pred_fallthru
          _
      $region12: #{tpu_custom_call.1} parent=5 // pred_fallthru
        _
      %p190 = scmp.lt.s32.totalorder %s17, 2
      // Predicated region
      $region25: #{tpu_custom_call.1} parent=5 // pred_check
        %p191 = pneg %p190
      $region26: #{tpu_custom_call.1} parent=5 // pred_check_branch
        %193 = sbr.rel (%p191) target = $region28
      $region27: #{tpu_custom_call.1} parent=5 // pred_region
        // Predicated region
        $region29: #{tpu_custom_call.1} parent=27 // pred_check
          %p194 = pneg %p51
        $region30: #{tpu_custom_call.1} parent=27 // pred_check_branch
          %196 = sbr.rel (%p194) target = $region32
        $region31: #{tpu_custom_call.1} parent=27 // pred_region
          %s197 = sand.u32 %s41, 1
          %s198 = scalar_lea.sflag [#allocation4], %s197
          %s199 = sand.u32 %s41, 1
          %s200 = smul.addr %s199, 128
          %s201 = scalar_lea.vmem [#allocation3], %s200
          %s202 = smul.u32 16, %s24
          %s203 = smul.u32 2, %s25
          %s205 = ssub.s32 2048, 2048
          %206 = vsyncadd %s198, %s205
          %s207 = smul.addr %s202, 2
          %s208 = sadd.s32 %s203, %s207
          %s209 = smul.addr %s208, 64
          %s210 = scalar_lea.hbm %s0, %s209
          %s211 = sshll.u32 %s201, 4
          %s212 = int_to_ptr.vmem [resolvable:$true] %s211
          %217 = dma.hbm_to_vmem [thread:$0]  %s210, 2048, %s212, %s198, 128, 128, 8
        $region32: #{tpu_custom_call.1} parent=27 // pred_fallthru
          _
      $region28: #{tpu_custom_call.1} parent=5 // pred_fallthru
        _
      %p218 = scmp.le.s32.totalorder 1, %s17
      %p219 = scmp.lt.s32.totalorder %s17, 3
      %p220 = pnand %p218, %p219
      %p221 = pneg %p220
      // Predicated region
      $region33: #{tpu_custom_call.1} parent=5 // pred_check
        _
      $region34: #{tpu_custom_call.1} parent=5 // pred_check_branch
        %223 = sbr.rel (%p220) target = $region36
      $region35: #{tpu_custom_call.1} parent=5 // pred_region
        %s224 = ssub.s32 %s17, 1
        %s225 = sand.u32 %s44, 1
        %s226 = scalar_lea.sflag [#allocation4], %s225
        %s227 = sand.u32 %s44, 1
        %s228 = smul.addr %s227, 128
        %s229 = scalar_lea.vmem [#allocation3], %s228
        // Predicated region
        $region37: #{tpu_custom_call.1} parent=35 // pred_check
          %p230 = pneg %p57
        $region38: #{tpu_custom_call.1} parent=35 // pred_check_branch
          %232 = sbr.rel (%p230) target = $region40
        $region39: #{tpu_custom_call.1} parent=35 // pred_region
          %233 = dma.done %s226, 2048
        $region40: #{tpu_custom_call.1} parent=35 // pred_fallthru
          _
        // Predicated region
        $region41: #{tpu_custom_call.1} parent=35 // pred_check
          %p234 = pneg %p78
        $region42: #{tpu_custom_call.1} parent=35 // pred_check_branch
          %236 = sbr.rel (%p234) target = $region44
        $region43: #{tpu_custom_call.1} parent=35 // pred_region
          %237 = dma.done [#allocation7], 2048
        $region44: #{tpu_custom_call.1} parent=35 // pred_fallthru
          _
        // Predicated region
        $region45: #{tpu_custom_call.1} parent=35 // pred_check
          %p238 = pneg %p99
        $region46: #{tpu_custom_call.1} parent=35 // pred_check_branch
          %240 = sbr.rel (%p238) target = $region48
        $region47: #{tpu_custom_call.1} parent=35 // pred_region
          %241 = dma.done [#allocation7], 2048
        $region48: #{tpu_custom_call.1} parent=35 // pred_fallthru
          _
        %s242 = sand.u32 %s44, 1
        %s243 = scalar_lea.sflag [#allocation4], %s242
        %s244 = sand.u32 %s44, 1
        %s245 = smul.addr %s244, 128
        %s246 = scalar_lea.vmem [#allocation3], %s245
        %p247 = pneg %p57
        %p248 = pneg %p54
        %p249 = pneg %p78
        %p250 = pneg %p75
        %p251 = pneg %p99
        %p252 = pneg %p96
        %p253 = pneg %p120
        %p254 = pneg %p117
        %p255 = pneg %p146
        %p256 = pneg %p143
        %s257 = sand.u32 %s133, 1
        %s258 = scalar_lea.sflag [#allocation5], %s257
        %s259 = sand.u32 %s133, 1
        %s260 = smul.addr %s259, 128
        %s261 = scalar_lea.vmem [#allocation9], %s260
        %s262 = smul.u32 16, %s26
        %s263 = smul.u32 2, %s27
        %s264 = smul.u32 16, %s26
        %p266 = scmp.eq.s32.totalorder %s27, 0
        // Predicated region
        $region49: #{tpu_custom_call.1} parent=35 // pred_check
          %p267 = pneg %p266
        $region50: #{tpu_custom_call.1} parent=35 // pred_check_branch
          %269 = sbr.rel (%p267) target = $region52
        $region51: #{tpu_custom_call.1} parent=35 // pred_region
          %270 = vst [vmem:[#allocation2] sm:$0xff] 0.0
          %271 = vst [vmem:[#allocation2 + $0x8] sm:$0xff] 0.0
          %272 = vst [vmem:[#allocation2 + $0x10] sm:$0xff] 0.0
          %273 = vst [vmem:[#allocation2 + $0x18] sm:$0xff] 0.0
          %274 = vst [vmem:[#allocation2 + $0x20] sm:$0xff] 0.0
          %275 = vst [vmem:[#allocation2 + $0x28] sm:$0xff] 0.0
          %276 = vst [vmem:[#allocation2 + $0x30] sm:$0xff] 0.0
          %277 = vst [vmem:[#allocation2 + $0x38] sm:$0xff] 0.0
          %278 = vst [vmem:[#allocation2 + $0x40] sm:$0xff] 0.0
          %279 = vst [vmem:[#allocation2 + $0x48] sm:$0xff] 0.0
          %280 = vst [vmem:[#allocation2 + $0x50] sm:$0xff] 0.0
          %281 = vst [vmem:[#allocation2 + $0x58] sm:$0xff] 0.0
          %282 = vst [vmem:[#allocation2 + $0x60] sm:$0xff] 0.0
          %283 = vst [vmem:[#allocation2 + $0x68] sm:$0xff] 0.0
          %284 = vst [vmem:[#allocation2 + $0x70] sm:$0xff] 0.0
          %285 = vst [vmem:[#allocation2 + $0x78] sm:$0xff] 0.0
        $region52: #{tpu_custom_call.1} parent=35 // pred_fallthru
          _
        %s286 = smul.u32 %s27, 256
        %s287 = sshra.s32 %s286, 3
        %s288 = sand.u32 %s286, 7
        %s289 = smul.addr %s287, 4
        %s290 = scalar_lea.vmem [#allocation6], %s289
        %v291 = vld [vmem:[%s290] sm:$0xf]
        %v292 = vld [vmem:[%s290 + $0x4] sm:$0xf]
        %v293 = vld [vmem:[%s290 + $0x8] sm:$0xf]
        %v294 = vld [vmem:[%s290 + $0xc] sm:$0xf]
        %v295 = vld [vmem:[%s290 + $0x10] sm:$0xf]
        %v296 = vld [vmem:[%s290 + $0x14] sm:$0xf]
        %v297 = vld [vmem:[%s290 + $0x18] sm:$0xf]
        %v298 = vld [vmem:[%s290 + $0x1c] sm:$0xf]
        %v299 = vld [vmem:[%s290 + $0x20] sm:$0xf]
        %v300 = vld [vmem:[%s290 + $0x24] sm:$0xf]
        %v301 = vld [vmem:[%s290 + $0x28] sm:$0xf]
        %v302 = vld [vmem:[%s290 + $0x2c] sm:$0xf]
        %v303 = vld [vmem:[%s290 + $0x30] sm:$0xf]
        %v304 = vld [vmem:[%s290 + $0x34] sm:$0xf]
        %v305 = vld [vmem:[%s290 + $0x38] sm:$0xf]
        %v306 = vld [vmem:[%s290 + $0x3c] sm:$0xf]
        %v307 = vld [vmem:[%s290 + $0x40] sm:$0xf]
        %v308 = vld [vmem:[%s290 + $0x44] sm:$0xf]
        %v309 = vld [vmem:[%s290 + $0x48] sm:$0xf]
        %v310 = vld [vmem:[%s290 + $0x4c] sm:$0xf]
        %v311 = vld [vmem:[%s290 + $0x50] sm:$0xf]
        %v312 = vld [vmem:[%s290 + $0x54] sm:$0xf]
        %v313 = vld [vmem:[%s290 + $0x58] sm:$0xf]
        %v314 = vld [vmem:[%s290 + $0x5c] sm:$0xf]
        %v315 = vld [vmem:[%s290 + $0x60] sm:$0xf]
        %v316 = vld [vmem:[%s290 + $0x64] sm:$0xf]
        %v317 = vld [vmem:[%s290 + $0x68] sm:$0xf]
        %v318 = vld [vmem:[%s290 + $0x6c] sm:$0xf]
        %v319 = vld [vmem:[%s290 + $0x70] sm:$0xf]
        %v320 = vld [vmem:[%s290 + $0x74] sm:$0xf]
        %v321 = vld [vmem:[%s290 + $0x78] sm:$0xf]
        %v322 = vld [vmem:[%s290 + $0x7c] sm:$0xf]
        %v323 = vld [vmem:[#allocation2] sm:$0xff]
        %v324 = vld [vmem:[#allocation2 + $0x8] sm:$0xff]
        %v325 = vld [vmem:[#allocation2 + $0x10] sm:$0xff]
        %v326 = vld [vmem:[#allocation2 + $0x18] sm:$0xff]
        %v327 = vld [vmem:[#allocation2 + $0x20] sm:$0xff]
        %v328 = vld [vmem:[#allocation2 + $0x28] sm:$0xff]
        %v329 = vld [vmem:[#allocation2 + $0x30] sm:$0xff]
        %v330 = vld [vmem:[#allocation2 + $0x38] sm:$0xff]
        %v331 = vld [vmem:[#allocation2 + $0x40] sm:$0xff]
        %v332 = vld [vmem:[#allocation2 + $0x48] sm:$0xff]
        %v333 = vld [vmem:[#allocation2 + $0x50] sm:$0xff]
        %v334 = vld [vmem:[#allocation2 + $0x58] sm:$0xff]
        %v335 = vld [vmem:[#allocation2 + $0x60] sm:$0xff]
        %v336 = vld [vmem:[#allocation2 + $0x68] sm:$0xff]
        %v337 = vld [vmem:[#allocation2 + $0x70] sm:$0xff]
        %v338 = vld [vmem:[#allocation2 + $0x78] sm:$0xff]
        %v339 = vld [vmem:[%s229] sm:$0xff]
        %v340 = vld [vmem:[%s229 + $0x8] sm:$0xff]
        %v341 = vld [vmem:[%s229 + $0x10] sm:$0xff]
        %v342 = vld [vmem:[%s229 + $0x18] sm:$0xff]
        %v343 = vld [vmem:[%s229 + $0x20] sm:$0xff]
        %v344 = vld [vmem:[%s229 + $0x28] sm:$0xff]
        %v345 = vld [vmem:[%s229 + $0x30] sm:$0xff]
        %v346 = vld [vmem:[%s229 + $0x38] sm:$0xff]
        %v347 = vld [vmem:[%s229 + $0x40] sm:$0xff]
        %v348 = vld [vmem:[%s229 + $0x48] sm:$0xff]
        %v349 = vld [vmem:[%s229 + $0x50] sm:$0xff]
        %v350 = vld [vmem:[%s229 + $0x58] sm:$0xff]
        %v351 = vld [vmem:[%s229 + $0x60] sm:$0xff]
        %v352 = vld [vmem:[%s229 + $0x68] sm:$0xff]
        %v353 = vld [vmem:[%s229 + $0x70] sm:$0xff]
        %v354 = vld [vmem:[%s229 + $0x78] sm:$0xff]
        %v371 = vunpack.c.l.b16 %v339
        %v372 = vunpack.c.h.b16 %v339
        %v373 = vunpack.c.l.b16 %v340
        %v374 = vunpack.c.h.b16 %v340
        %v375 = vunpack.c.l.b16 %v341
        %v376 = vunpack.c.h.b16 %v341
        %v377 = vunpack.c.l.b16 %v342
        %v378 = vunpack.c.h.b16 %v342
        %v379 = vunpack.c.l.b16 %v343
        %v380 = vunpack.c.h.b16 %v343
        %v381 = vunpack.c.l.b16 %v344
        %v382 = vunpack.c.h.b16 %v344
        %v383 = vunpack.c.l.b16 %v345
        %v384 = vunpack.c.h.b16 %v345
        %v385 = vunpack.c.l.b16 %v346
        %v386 = vunpack.c.h.b16 %v346
        %v387 = vunpack.c.l.b16 %v347
        %v388 = vunpack.c.h.b16 %v347
        %v389 = vunpack.c.l.b16 %v348
        %v390 = vunpack.c.h.b16 %v348
        %v391 = vunpack.c.l.b16 %v349
        %v392 = vunpack.c.h.b16 %v349
        %v393 = vunpack.c.l.b16 %v350
        %v394 = vunpack.c.h.b16 %v350
        %v395 = vunpack.c.l.b16 %v351
        %v396 = vunpack.c.h.b16 %v351
        %v397 = vunpack.c.l.b16 %v352
        %v398 = vunpack.c.h.b16 %v352
        %v399 = vunpack.c.l.b16 %v353
        %v400 = vunpack.c.h.b16 %v353
        %v401 = vunpack.c.l.b16 %v354
        %v402 = vunpack.c.h.b16 %v354
        %v403 = vpack.c.b16 %v373, %v371
        %v404 = vpack.c.b16 %v374, %v372
        %v405 = vpack.c.b16 %v377, %v375
        %v406 = vpack.c.b16 %v378, %v376
        %v407 = vpack.c.b16 %v381, %v379
        %v408 = vpack.c.b16 %v382, %v380
        %v409 = vpack.c.b16 %v385, %v383
        %v410 = vpack.c.b16 %v386, %v384
        %v411 = vpack.c.b16 %v389, %v387
        %v412 = vpack.c.b16 %v390, %v388
        %v413 = vpack.c.b16 %v393, %v391
        %v414 = vpack.c.b16 %v394, %v392
        %v415 = vpack.c.b16 %v397, %v395
        %v416 = vpack.c.b16 %v398, %v396
        %v417 = vpack.c.b16 %v401, %v399
        %v418 = vpack.c.b16 %v402, %v400
        %v467 = vunpack.c.l.b16 %v291
        %v468 = vunpack.c.l.b16 %v292
        %v469 = vunpack.c.l.b16 %v293
        %v470 = vunpack.c.l.b16 %v294
        %v471 = vunpack.c.l.b16 %v295
        %v472 = vunpack.c.l.b16 %v296
        %v473 = vunpack.c.l.b16 %v297
        %v474 = vunpack.c.l.b16 %v298
        %v475 = vunpack.c.l.b16 %v299
        %v476 = vunpack.c.l.b16 %v300
        %v477 = vunpack.c.l.b16 %v301
        %v478 = vunpack.c.l.b16 %v302
        %v479 = vunpack.c.l.b16 %v303
        %v480 = vunpack.c.l.b16 %v304
        %v481 = vunpack.c.l.b16 %v305
        %v482 = vunpack.c.l.b16 %v306
        %v483 = vunpack.c.l.b16 %v307
        %v484 = vunpack.c.l.b16 %v308
        %v485 = vunpack.c.l.b16 %v309
        %v486 = vunpack.c.l.b16 %v310
        %v487 = vunpack.c.l.b16 %v311
        %v488 = vunpack.c.l.b16 %v312
        %v489 = vunpack.c.l.b16 %v313
        %v490 = vunpack.c.l.b16 %v314
        %v491 = vunpack.c.l.b16 %v315
        %v492 = vunpack.c.l.b16 %v316
        %v493 = vunpack.c.l.b16 %v317
        %v494 = vunpack.c.l.b16 %v318
        %v495 = vunpack.c.l.b16 %v319
        %v496 = vunpack.c.l.b16 %v320
        %v497 = vunpack.c.l.b16 %v321
        %v498 = vunpack.c.l.b16 %v322
        %v499 = vpack.c.b16 %v468, %v467
        %v500 = vpack.c.b16 %v470, %v469
        %v501 = vpack.c.b16 %v472, %v471
        %v502 = vpack.c.b16 %v474, %v473
        %v503 = vpack.c.b16 %v476, %v475
        %v504 = vpack.c.b16 %v478, %v477
        %v505 = vpack.c.b16 %v480, %v479
        %v506 = vpack.c.b16 %v482, %v481
        %v507 = vpack.c.b16 %v484, %v483
        %v508 = vpack.c.b16 %v486, %v485
        %v509 = vpack.c.b16 %v488, %v487
        %v510 = vpack.c.b16 %v490, %v489
        %v511 = vpack.c.b16 %v492, %v491
        %v512 = vpack.c.b16 %v494, %v493
        %v513 = vpack.c.b16 %v496, %v495
        %v514 = vpack.c.b16 %v498, %v497
        %531 = vmatprep.subr.bf16.mxu0 0
        %532 = vmatpush1.bf16.msra.mxu0 %v506
        %533 = vmatprep.subr.bf16.mxu0 0
        %534 = vmatpush1.bf16.msra.mxu0 %v505
        %535 = vmatprep.subr.bf16.mxu0 0
        %536 = vmatpush1.bf16.msra.mxu0 %v504
        %537 = vmatprep.subr.bf16.mxu0 0
        %538 = vmatpush1.bf16.msra.mxu0 %v503
        %539 = vmatprep.subr.bf16.mxu0 0
        %540 = vmatpush1.bf16.msra.mxu0 %v502
        %541 = vmatprep.subr.bf16.mxu0 0
        %542 = vmatpush1.bf16.msra.mxu0 %v501
        %543 = vmatprep.subr.bf16.mxu0 0
        %544 = vmatpush1.bf16.msra.mxu0 %v500
        %545 = vmatprep.subr.bf16.mxu0 0
        %546 = vmatpush1.bf16.msra.mxu0 %v499
        %547 = vmatprep.subr.bf16.mxu0 0
        %548 = vmatpush2.bf16.msra.mxu0 %v514
        %549 = vmatprep.subr.bf16.mxu0 0
        %550 = vmatpush2.bf16.msra.mxu0 %v513
        %551 = vmatprep.subr.bf16.mxu0 0
        %552 = vmatpush2.bf16.msra.mxu0 %v512
        %553 = vmatprep.subr.bf16.mxu0 0
        %554 = vmatpush2.bf16.msra.mxu0 %v511
        %555 = vmatprep.subr.bf16.mxu0 0
        %556 = vmatpush2.bf16.msra.mxu0 %v510
        %557 = vmatprep.subr.bf16.mxu0 0
        %558 = vmatpush2.bf16.msra.mxu0 %v509
        %559 = vmatprep.subr.bf16.mxu0 0
        %560 = vmatpush2.bf16.msra.mxu0 %v508
        %561 = vmatprep.subr.bf16.mxu0 0
        %562 = vmatpush2.bf16.msra.mxu0 %v507
        %563 = vmatprep.mubr.bf16.mxu0 %v404
        %564 = vmatmul.mubr.bf16.gmra.mxu0 %v403
        %v565 = vpop.f32.mrf.mxu0
        %v566 = vadd.f32 0.0, %v565
        %v567 = vpop.f32.mrf.mxu0
        %v568 = vpop.f32.mrf.mxu0
        %v569 = vadd.f32 0.0, %v568
        %v570 = vpop.f32.mrf.mxu0
        %571 = vmatprep.mubr.bf16.mxu0 %v406
        %572 = vmatmul.mubr.bf16.gmra.mxu0 %v405
        %v573 = vpop.f32.mrf.mxu0
        %v574 = vadd.f32 0.0, %v573
        %v575 = vpop.f32.mrf.mxu0
        %v576 = vpop.f32.mrf.mxu0
        %v577 = vadd.f32 0.0, %v576
        %v578 = vpop.f32.mrf.mxu0
        %579 = vmatprep.mubr.bf16.mxu0 %v408
        %580 = vmatmul.mubr.bf16.gmra.mxu0 %v407
        %v581 = vpop.f32.mrf.mxu0
        %v582 = vadd.f32 0.0, %v581
        %v583 = vpop.f32.mrf.mxu0
        %v584 = vpop.f32.mrf.mxu0
        %v585 = vadd.f32 0.0, %v584
        %v586 = vpop.f32.mrf.mxu0
        %587 = vmatprep.mubr.bf16.mxu0 %v410
        %588 = vmatmul.mubr.bf16.gmra.mxu0 %v409
        %v589 = vpop.f32.mrf.mxu0
        %v590 = vadd.f32 0.0, %v589
        %v591 = vpop.f32.mrf.mxu0
        %v592 = vpop.f32.mrf.mxu0
        %v593 = vadd.f32 0.0, %v592
        %v594 = vpop.f32.mrf.mxu0
        %595 = vmatprep.mubr.bf16.mxu0 %v412
        %596 = vmatmul.mubr.bf16.gmra.mxu0 %v411
        %v597 = vpop.f32.mrf.mxu0
        %v598 = vadd.f32 0.0, %v597
        %v599 = vpop.f32.mrf.mxu0
        %v600 = vpop.f32.mrf.mxu0
        %v601 = vadd.f32 0.0, %v600
        %v602 = vpop.f32.mrf.mxu0
        %603 = vmatprep.mubr.bf16.mxu0 %v414
        %604 = vmatmul.mubr.bf16.gmra.mxu0 %v413
        %v605 = vpop.f32.mrf.mxu0
        %v606 = vadd.f32 0.0, %v605
        %v607 = vpop.f32.mrf.mxu0
        %v608 = vpop.f32.mrf.mxu0
        %v609 = vadd.f32 0.0, %v608
        %v610 = vpop.f32.mrf.mxu0
        %611 = vmatprep.mubr.bf16.mxu0 %v416
        %612 = vmatmul.mubr.bf16.gmra.mxu0 %v415
        %v613 = vpop.f32.mrf.mxu0
        %v614 = vadd.f32 0.0, %v613
        %v615 = vpop.f32.mrf.mxu0
        %v616 = vpop.f32.mrf.mxu0
        %v617 = vadd.f32 0.0, %v616
        %v618 = vpop.f32.mrf.mxu0
        %619 = vmatprep.mubr.bf16.mxu0 %v418
        %620 = vmatmul.mubr.bf16.gmra.mxu0 %v417
        %v621 = vpop.f32.mrf.mxu0
        %v622 = vadd.f32 0.0, %v621
        %v623 = vpop.f32.mrf.mxu0
        %v624 = vpop.f32.mrf.mxu0
        %v625 = vadd.f32 0.0, %v624
        %v626 = vpop.f32.mrf.mxu0
        %627 = vdwg.mxu0
        %v628 = vadd.f32 %v323, %v566
        %v629 = vadd.f32 %v324, %v569
        %v630 = vadd.f32 %v325, %v574
        %v631 = vadd.f32 %v326, %v577
        %v632 = vadd.f32 %v327, %v582
        %v633 = vadd.f32 %v328, %v585
        %v634 = vadd.f32 %v329, %v590
        %v635 = vadd.f32 %v330, %v593
        %v636 = vadd.f32 %v331, %v598
        %v637 = vadd.f32 %v332, %v601
        %v638 = vadd.f32 %v333, %v606
        %v639 = vadd.f32 %v334, %v609
        %v640 = vadd.f32 %v335, %v614
        %v641 = vadd.f32 %v336, %v617
        %v642 = vadd.f32 %v337, %v622
        %v643 = vadd.f32 %v338, %v625
        %644 = vst [vmem:[#allocation2] sm:$0xff] %v628
        %645 = vst [vmem:[#allocation2 + $0x8] sm:$0xff] %v629
        %646 = vst [vmem:[#allocation2 + $0x10] sm:$0xff] %v630
        %647 = vst [vmem:[#allocation2 + $0x18] sm:$0xff] %v631
        %648 = vst [vmem:[#allocation2 + $0x20] sm:$0xff] %v632
        %649 = vst [vmem:[#allocation2 + $0x28] sm:$0xff] %v633
        %650 = vst [vmem:[#allocation2 + $0x30] sm:$0xff] %v634
        %651 = vst [vmem:[#allocation2 + $0x38] sm:$0xff] %v635
        %652 = vst [vmem:[#allocation2 + $0x40] sm:$0xff] %v636
        %653 = vst [vmem:[#allocation2 + $0x48] sm:$0xff] %v637
        %654 = vst [vmem:[#allocation2 + $0x50] sm:$0xff] %v638
        %655 = vst [vmem:[#allocation2 + $0x58] sm:$0xff] %v639
        %656 = vst [vmem:[#allocation2 + $0x60] sm:$0xff] %v640
        %657 = vst [vmem:[#allocation2 + $0x68] sm:$0xff] %v641
        %658 = vst [vmem:[#allocation2 + $0x70] sm:$0xff] %v642
        %659 = vst [vmem:[#allocation2 + $0x78] sm:$0xff] %v643
        // Predicated region
        $region53: #{tpu_custom_call.1} parent=35 // pred_check
          %p660 = pneg %p266
        $region54: #{tpu_custom_call.1} parent=35 // pred_check_branch
          %662 = sbr.rel (%p660) target = $region56
        $region55: #{tpu_custom_call.1} parent=35 // pred_region
          %v663 = vld [vmem:[#allocation2] sm:$0xff]
          %v664 = vld [vmem:[#allocation2 + $0x8] sm:$0xff]
          %v665 = vld [vmem:[#allocation2 + $0x10] sm:$0xff]
          %v666 = vld [vmem:[#allocation2 + $0x18] sm:$0xff]
          %v667 = vld [vmem:[#allocation2 + $0x20] sm:$0xff]
          %v668 = vld [vmem:[#allocation2 + $0x28] sm:$0xff]
          %v669 = vld [vmem:[#allocation2 + $0x30] sm:$0xff]
          %v670 = vld [vmem:[#allocation2 + $0x38] sm:$0xff]
          %v671 = vld [vmem:[#allocation2 + $0x40] sm:$0xff]
          %v672 = vld [vmem:[#allocation2 + $0x48] sm:$0xff]
          %v673 = vld [vmem:[#allocation2 + $0x50] sm:$0xff]
          %v674 = vld [vmem:[#allocation2 + $0x58] sm:$0xff]
          %v675 = vld [vmem:[#allocation2 + $0x60] sm:$0xff]
          %v676 = vld [vmem:[#allocation2 + $0x68] sm:$0xff]
          %v677 = vld [vmem:[#allocation2 + $0x70] sm:$0xff]
          %v678 = vld [vmem:[#allocation2 + $0x78] sm:$0xff]
          %v679 = vld [vmem:[#allocation8] sm:$0xff]
          %v680 = vld [vmem:[#allocation8 + $0x8] sm:$0xff]
          %v681 = vld [vmem:[#allocation8 + $0x10] sm:$0xff]
          %v682 = vld [vmem:[#allocation8 + $0x18] sm:$0xff]
          %v683 = vld [vmem:[#allocation8 + $0x20] sm:$0xff]
          %v684 = vld [vmem:[#allocation8 + $0x28] sm:$0xff]
          %v685 = vld [vmem:[#allocation8 + $0x30] sm:$0xff]
          %v686 = vld [vmem:[#allocation8 + $0x38] sm:$0xff]
          %v687 = vld [vmem:[#allocation8 + $0x40] sm:$0xff]
          %v688 = vld [vmem:[#allocation8 + $0x48] sm:$0xff]
          %v689 = vld [vmem:[#allocation8 + $0x50] sm:$0xff]
          %v690 = vld [vmem:[#allocation8 + $0x58] sm:$0xff]
          %v691 = vld [vmem:[#allocation8 + $0x60] sm:$0xff]
          %v692 = vld [vmem:[#allocation8 + $0x68] sm:$0xff]
          %v693 = vld [vmem:[#allocation8 + $0x70] sm:$0xff]
          %v694 = vld [vmem:[#allocation8 + $0x78] sm:$0xff]
          %v695 = vld [vmem:[%s3] sm:$0x1]
          %v697 = vlaneseq
          %v698 = vshrl.u32 %v697, 7
          %v699 = vsub.s32 0, %v698
          %v700 = vrot.slane %v695, %v699
          %702 = vmatprep.subr.mxu0 0.0
          %703 = vmatpush1.msra.mxu0 %v694
          %704 = vmatprep.subr.mxu0 0.0
          %705 = vmatpush1.msra.mxu0 %v693
          %706 = vmatprep.subr.mxu0 0.0
          %707 = vmatpush1.msra.mxu0 %v692
          %708 = vmatprep.subr.mxu0 0.0
          %709 = vmatpush1.msra.mxu0 %v691
          %710 = vmatprep.subr.mxu0 0.0
          %711 = vmatpush1.msra.mxu0 %v690
          %712 = vmatprep.subr.mxu0 0.0
          %713 = vmatpush1.msra.mxu0 %v689
          %714 = vmatprep.subr.mxu0 0.0
          %715 = vmatpush1.msra.mxu0 %v688
          %716 = vmatprep.subr.mxu0 0.0
          %717 = vmatpush1.msra.mxu0 %v687
          %718 = vmatprep.subr.mxu0 0.0
          %719 = vmatpush1.msra.mxu0 %v686
          %720 = vmatprep.subr.mxu0 0.0
          %721 = vmatpush1.msra.mxu0 %v685
          %722 = vmatprep.subr.mxu0 0.0
          %723 = vmatpush1.msra.mxu0 %v684
          %724 = vmatprep.subr.mxu0 0.0
          %725 = vmatpush1.msra.mxu0 %v683
          %726 = vmatprep.subr.mxu0 0.0
          %727 = vmatpush1.msra.mxu0 %v682
          %728 = vmatprep.subr.mxu0 0.0
          %729 = vmatpush1.msra.mxu0 %v681
          %730 = vmatprep.subr.mxu0 0.0
          %731 = vmatpush1.msra.mxu0 %v680
          %732 = vmatprep.subr.mxu0 0.0
          %733 = vmatpush1.msra.mxu0 %v679
          %734 = vmatprep.subr.mxu0 0.0
          %735 = vmatpush2.msra.mxu0 0.0
          %736 = vmatprep.subr.mxu0 0.0
          %737 = vmatpush2.msra.mxu0 0.0
          %738 = vmatprep.subr.mxu0 0.0
          %739 = vmatpush2.msra.mxu0 0.0
          %740 = vmatprep.subr.mxu0 0.0
          %741 = vmatpush2.msra.mxu0 0.0
          %742 = vmatprep.subr.mxu0 0.0
          %743 = vmatpush2.msra.mxu0 0.0
          %744 = vmatprep.subr.mxu0 0.0
          %745 = vmatpush2.msra.mxu0 0.0
          %746 = vmatprep.subr.mxu0 0.0
          %747 = vmatpush2.msra.mxu0 0.0
          %748 = vmatprep.subr.mxu0 0.0
          %749 = vmatpush2.msra.mxu0 0.0
          %750 = vmatprep.subr.mxu0 0.0
          %751 = vmatpush2.msra.mxu0 0.0
          %752 = vmatprep.subr.mxu0 0.0
          %753 = vmatpush2.msra.mxu0 0.0
          %754 = vmatprep.subr.mxu0 0.0
          %755 = vmatpush2.msra.mxu0 0.0
          %756 = vmatprep.subr.mxu0 0.0
          %757 = vmatpush2.msra.mxu0 0.0
          %758 = vmatprep.subr.mxu0 0.0
          %759 = vmatpush2.msra.mxu0 0.0
          %760 = vmatprep.subr.mxu0 0.0
          %761 = vmatpush2.msra.mxu0 0.0
          %762 = vmatprep.subr.mxu0 0.0
          %763 = vmatpush2.msra.mxu0 0.0
          %764 = vmatprep.subr.mxu0 0.0
          %765 = vmatpush2.msra.mxu0 0.0
          %766 = vmatprep.mubr.f32.mxu0 0.0
          %767 = vmatmul.mubr.f32.gmra.mxu0 %v663
          %v768 = vpop.f32.mrf.mxu0
          %v769 = vadd.f32 %v700, %v768
          %v770 = vpop.f32.mrf.mxu0
          %771 = vmatprep.mubr.f32.mxu0 0.0
          %772 = vmatmul.mubr.f32.gmra.mxu0 %v664
          %v773 = vpop.f32.mrf.mxu0
          %v774 = vadd.f32 %v700, %v773
          %v775 = vpop.f32.mrf.mxu0
          %776 = vmatprep.mubr.f32.mxu0 0.0
          %777 = vmatmul.mubr.f32.gmra.mxu0 %v665
          %v778 = vpop.f32.mrf.mxu0
          %v779 = vadd.f32 %v700, %v778
          %v780 = vpop.f32.mrf.mxu0
          %781 = vmatprep.mubr.f32.mxu0 0.0
          %782 = vmatmul.mubr.f32.gmra.mxu0 %v666
          %v783 = vpop.f32.mrf.mxu0
          %v784 = vadd.f32 %v700, %v783
          %v785 = vpop.f32.mrf.mxu0
          %786 = vmatprep.mubr.f32.mxu0 0.0
          %787 = vmatmul.mubr.f32.gmra.mxu0 %v667
          %v788 = vpop.f32.mrf.mxu0
          %v789 = vadd.f32 %v700, %v788
          %v790 = vpop.f32.mrf.mxu0
          %791 = vmatprep.mubr.f32.mxu0 0.0
          %792 = vmatmul.mubr.f32.gmra.mxu0 %v668
          %v793 = vpop.f32.mrf.mxu0
          %v794 = vadd.f32 %v700, %v793
          %v795 = vpop.f32.mrf.mxu0
          %796 = vmatprep.mubr.f32.mxu0 0.0
          %797 = vmatmul.mubr.f32.gmra.mxu0 %v669
          %v798 = vpop.f32.mrf.mxu0
          %v799 = vadd.f32 %v700, %v798
          %v800 = vpop.f32.mrf.mxu0
          %801 = vmatprep.mubr.f32.mxu0 0.0
          %802 = vmatmul.mubr.f32.gmra.mxu0 %v670
          %v803 = vpop.f32.mrf.mxu0
          %v804 = vadd.f32 %v700, %v803
          %v805 = vpop.f32.mrf.mxu0
          %806 = vmatprep.mubr.f32.mxu0 0.0
          %807 = vmatmul.mubr.f32.gmra.mxu0 %v671
          %v808 = vpop.f32.mrf.mxu0
          %v809 = vadd.f32 %v700, %v808
          %v810 = vpop.f32.mrf.mxu0
          %811 = vmatprep.mubr.f32.mxu0 0.0
          %812 = vmatmul.mubr.f32.gmra.mxu0 %v672
          %v813 = vpop.f32.mrf.mxu0
          %v814 = vadd.f32 %v700, %v813
          %v815 = vpop.f32.mrf.mxu0
          %816 = vmatprep.mubr.f32.mxu0 0.0
          %817 = vmatmul.mubr.f32.gmra.mxu0 %v673
          %v818 = vpop.f32.mrf.mxu0
          %v819 = vadd.f32 %v700, %v818
          %v820 = vpop.f32.mrf.mxu0
          %821 = vmatprep.mubr.f32.mxu0 0.0
          %822 = vmatmul.mubr.f32.gmra.mxu0 %v674
          %v823 = vpop.f32.mrf.mxu0
          %v824 = vadd.f32 %v700, %v823
          %v825 = vpop.f32.mrf.mxu0
          %826 = vmatprep.mubr.f32.mxu0 0.0
          %827 = vmatmul.mubr.f32.gmra.mxu0 %v675
          %v828 = vpop.f32.mrf.mxu0
          %v829 = vadd.f32 %v700, %v828
          %v830 = vpop.f32.mrf.mxu0
          %831 = vmatprep.mubr.f32.mxu0 0.0
          %832 = vmatmul.mubr.f32.gmra.mxu0 %v676
          %v833 = vpop.f32.mrf.mxu0
          %v834 = vadd.f32 %v700, %v833
          %v835 = vpop.f32.mrf.mxu0
          %836 = vmatprep.mubr.f32.mxu0 0.0
          %837 = vmatmul.mubr.f32.gmra.mxu0 %v677
          %v838 = vpop.f32.mrf.mxu0
          %v839 = vadd.f32 %v700, %v838
          %v840 = vpop.f32.mrf.mxu0
          %841 = vmatprep.mubr.f32.mxu0 0.0
          %842 = vmatmul.mubr.f32.gmra.mxu0 %v678
          %v843 = vpop.f32.mrf.mxu0
          %v844 = vadd.f32 %v700, %v843
          %v845 = vpop.f32.mrf.mxu0
          %846 = vdwg.mxu0
          %v847 = vmax.f32 %v769, 0.0
          %v848 = vmax.f32 %v774, 0.0
          %v849 = vmax.f32 %v779, 0.0
          %v850 = vmax.f32 %v784, 0.0
          %v851 = vmax.f32 %v789, 0.0
          %v852 = vmax.f32 %v794, 0.0
          %v853 = vmax.f32 %v799, 0.0
          %v854 = vmax.f32 %v804, 0.0
          %v855 = vmax.f32 %v809, 0.0
          %v856 = vmax.f32 %v814, 0.0
          %v857 = vmax.f32 %v819, 0.0
          %v858 = vmax.f32 %v824, 0.0
          %v859 = vmax.f32 %v829, 0.0
          %v860 = vmax.f32 %v834, 0.0
          %v861 = vmax.f32 %v839, 0.0
          %v862 = vmax.f32 %v844, 0.0
          %863 = vst [vmem:[%s261] sm:$0xff] %v847
          %864 = vst [vmem:[%s261 + $0x8] sm:$0xff] %v848
          %865 = vst [vmem:[%s261 + $0x10] sm:$0xff] %v849
          %866 = vst [vmem:[%s261 + $0x18] sm:$0xff] %v850
          %867 = vst [vmem:[%s261 + $0x20] sm:$0xff] %v851
          %868 = vst [vmem:[%s261 + $0x28] sm:$0xff] %v852
          %869 = vst [vmem:[%s261 + $0x30] sm:$0xff] %v853
          %870 = vst [vmem:[%s261 + $0x38] sm:$0xff] %v854
          %871 = vst [vmem:[%s261 + $0x40] sm:$0xff] %v855
          %872 = vst [vmem:[%s261 + $0x48] sm:$0xff] %v856
          %873 = vst [vmem:[%s261 + $0x50] sm:$0xff] %v857
          %874 = vst [vmem:[%s261 + $0x58] sm:$0xff] %v858
          %875 = vst [vmem:[%s261 + $0x60] sm:$0xff] %v859
          %876 = vst [vmem:[%s261 + $0x68] sm:$0xff] %v860
          %877 = vst [vmem:[%s261 + $0x70] sm:$0xff] %v861
          %878 = vst [vmem:[%s261 + $0x78] sm:$0xff] %v862
        $region56: #{tpu_custom_call.1} parent=35 // pred_fallthru
          _
        %s879 = sand.u32 %s133, 1
        %s880 = scalar_lea.sflag [#allocation5], %s879
        %s881 = sand.u32 %s133, 1
        %s882 = smul.addr %s881, 128
        %s883 = scalar_lea.vmem [#allocation9], %s882
        // Predicated region
        $region57: #{tpu_custom_call.1} parent=35 // pred_check
          %p884 = pneg %p143
        $region58: #{tpu_custom_call.1} parent=35 // pred_check_branch
          %886 = sbr.rel (%p884) target = $region60
        $region59: #{tpu_custom_call.1} parent=35 // pred_region
          %s887 = smul.u32 16, %s26
          %s889 = ssub.s32 2048, 2048
          %890 = vsyncadd %s880, %s889
          %s891 = smul.addr %s887, 128
          %s892 = scalar_lea.hbm %s4, %s891
          %s893 = sshll.u32 %s883, 4
          %s894 = int_to_ptr.vmem [resolvable:$true] %s893
          %899 = dma.vmem_to_hbm [thread:$0]  %s894, 2048, %s892, %s880, 128, 128, 8
        $region60: #{tpu_custom_call.1} parent=35 // pred_fallthru
          _
      $region36: #{tpu_custom_call.1} parent=5 // pred_fallthru
        _
      %p900 = scmp.le.s32.totalorder 2, %s17
      // Predicated region
      $region61: #{tpu_custom_call.1} parent=5 // pred_check
        %p901 = pneg %p900
      $region62: #{tpu_custom_call.1} parent=5 // pred_check_branch
        %903 = sbr.rel (%p901) target = $region64
      $region63: #{tpu_custom_call.1} parent=5 // pred_region
        %s904 = ssub.s32 %s17, 2
        // Predicated region
        $region65: #{tpu_custom_call.1} parent=63 // pred_check
          %p905 = pneg %p149
        $region66: #{tpu_custom_call.1} parent=63 // pred_check_branch
          %907 = sbr.rel (%p905) target = $region68
        $region67: #{tpu_custom_call.1} parent=63 // pred_region
          %s908 = sand.u32 %s134, 1
          %s909 = scalar_lea.sflag [#allocation5], %s908
          %s910 = sand.u32 %s134, 1
          %s911 = smul.addr %s910, 128
          %s912 = scalar_lea.vmem [#allocation9], %s911
          %913 = dma.done %s909, 2048
        $region68: #{tpu_custom_call.1} parent=63 // pred_fallthru
          _
      $region64: #{tpu_custom_call.1} parent=5 // pred_fallthru
        _
    $region6: #{tpu_custom_call.1} parent=1 // loop_footer
      %s21 = sadd.s32 1, %s17
    $region7: #{tpu_custom_call.1} parent=1 // loop_footer_branch
      %16 = sbr.rel target = $region3
    $region8: #{tpu_custom_call.1} parent=1 // loop_exit
      _
    %914 = vsyncpa [#allocation4], 1
    %s915 = scalar_lea.sflag [#allocation4], 1
    %916 = vsyncpa %s915, 1
    %917 = vsyncpa [#allocation7], 1
    %918 = vsyncpa [#allocation5], 1
    %s919 = scalar_lea.sflag [#allocation5], 1
    %920 = vsyncpa %s919, 1

</llo_original>
